<compile_context>
chip_gen: v5e
topology: v5e:2x2
jax: 0.10.0
libtpu: 0.0.40
codegen_flags: <defaults>
</compile_context>

<pallas_src>
import functools

import jax
import jax.numpy as jnp
from jax.experimental import pallas as pl
from jax.experimental.pallas import tpu as pltpu


def _focal_nll_kernel(logits_ref, target_ref, out_ref, acc_ref, *,
                      n_valid, tile_n, tiles_per_slot):
    s = pl.program_id(0)   # "parallel" slot (one per TensorCore on two-core chips)
    t = pl.program_id(1)   # "arbitrary" reduction over batch tiles

    @pl.when(t == 0)
    def _():
        acc_ref[...] = jnp.zeros_like(acc_ref)

    x = logits_ref[...].astype(jnp.float32)                      # (tile_n, C)
    tgt = target_ref[...]                                        # (tile_n, 1) int32

    # Numerically-stable per-row log-sum-exp (matches torch CrossEntropyLoss).
    # XLU reduces + EUP exp/log sit in otherwise-idle slots under the input DMA.
    m = jnp.max(x, axis=-1, keepdims=True)                       # (tile_n, 1)
    lse = m + jnp.log(jnp.sum(jnp.exp(x - m), axis=-1, keepdims=True))

    # Gather-free "picked logit": compare class-index iota against the target column.
    col = jax.lax.broadcasted_iota(jnp.int32, x.shape, 1)        # (tile_n, C)
    picked = jnp.sum(jnp.where(col == tgt, x, 0.0), axis=-1, keepdims=True)

    nll = lse - picked                                           # (tile_n, 1)

    # Mask rows past the end of the (un-padded) batch: covers the partial last block and
    # any duplicated block produced by the clamped index_map. jnp.where does not propagate
    # NaN from the unselected branch, so garbage rows contribute exactly 0.
    base = (s * tiles_per_slot + t) * tile_n
    row = base + jax.lax.broadcasted_iota(jnp.int32, (tile_n, 1), 0)
    nll = jnp.where(row < n_valid, nll, 0.0)

    # Per-row partial sums; no full cross-sublane reduce per grid step.
    acc_ref[...] += nll

    @pl.when(t == pl.num_programs(1) - 1)
    def _():
        slot_sum = jnp.sum(acc_ref[...])                         # one reduce per slot
        out_ref[...] = jnp.broadcast_to(slot_sum, out_ref.shape).astype(out_ref.dtype)


def _chip_config():
    """Returns (vmem_limit_bytes, streaming_budget_bytes, two_tensorcores)."""
    vmem_cap = None
    try:
        info = pltpu.get_tpu_info()
        vmem_cap = int(getattr(info, "vmem_capacity_bytes", 0)) or None
    except Exception:
        vmem_cap = None

    two_cores = False
    try:
        kind = jax.devices()[0].device_kind.lower()
        # Two TensorCores per Pallas device: v4 (megacore) and v7x.
        two_cores = ("v4" in kind) or ("v7" in kind) or ("7x" in kind)
    except Exception:
        two_cores = False

    if vmem_cap is not None and vmem_cap >= (100 << 20):
        # v5e / v6e class: 128 MiB physical VMEM.
        return 96 << 20, 40 << 20, two_cores
    # v7x class (64 MiB physical) or unknown -> conservative, v7x-safe.
    return 48 << 20, 20 << 20, two_cores


def focal_loss(logits, target, *, gamma=0.0, eps=1e-7, tile_n=None):
    """logits: (N, C) float (f32 or bf16), target: (N,) int class indices. Returns scalar f32."""
    del eps  # declared but unused in the reference forward
    n, c = logits.shape
    itemsize = jnp.dtype(logits.dtype).itemsize

    vmem_limit, budget, two_cores = _chip_config()

    # Per-row VMEM bytes: logits double-buffer + lane-padded (tile_n,1) int32 target
    # double-buffer (pads to 128 lanes) + lane-padded (tile_n,1) f32 accumulator.
    bytes_per_row = 2 * c * itemsize + 2 * 128 * 4 + 128 * 4
    if 8 * bytes_per_row > budget:
        # TODO(synk): add class-axis tiling with an online LSE for vocab-sized C.
        raise NotImplementedError(
            f"C={c} too large for single-pass LSE within the {budget >> 20} MiB VMEM budget")

    n_rows_padded = -(-n // 8) * 8

    if tile_n is None:
        tile_n = budget // bytes_per_row
        # Byte-based cap on a single logits block (~8 MiB) so per-step DMA stays multi-MiB
        # but the pipeline still has a few steps to overlap.
        tile_n = min(tile_n, (8 << 20) // max(1, c * itemsize))
        tile_n = min(tile_n, n_rows_padded)
        tile_n = max(8, (tile_n // 8) * 8)
        if two_cores and -(-n // tile_n) < 8:
            # Load balance the two TensorCores: aim for >= 4 real tiles per core when N allows.
            tile_n = max(8, min(tile_n, (n // 64) * 8))
    tile_n = int(tile_n)
    assert tile_n % 8 == 0, "tile_n must be a multiple of 8 (sublane granularity)"

    tiles_total = -(-n // tile_n)
    num_slots = 2 if (two_cores and tiles_total >= 2) else 1
    tiles_per_slot = -(-tiles_total // num_slots)
    last_block = tiles_total - 1

    # No pad of the logits (saves a full HBM copy); target is tiny, just reshape to (N, 1).
    target2d = target.astype(jnp.int32).reshape(n, 1)

    kernel = functools.partial(
        _focal_nll_kernel, n_valid=n, tile_n=tile_n, tiles_per_slot=tiles_per_slot)

    def row_block(s, t):
        # Clamp so an odd tiles_total with 2 slots never addresses a block fully past the
        # end of the array; duplicated rows are zeroed in-kernel by the row < n_valid mask.
        b = s * tiles_per_slot + t
        return (jnp.minimum(b, last_block), 0)

    out = pl.pallas_call(
        kernel,
        out_shape=jax.ShapeDtypeStruct((num_slots * 8, 128), jnp.float32),
        grid_spec=pltpu.PrefetchScalarGridSpec(
            num_scalar_prefetch=0,
            grid=(num_slots, tiles_per_slot),
            in_specs=[
                pl.BlockSpec((tile_n, c), row_block),
                pl.BlockSpec((tile_n, 1), row_block),
            ],
            out_specs=pl.BlockSpec((8, 128), lambda s, t: (s, 0)),
            scratch_shapes=[pltpu.VMEM((tile_n, 1), jnp.float32)],
        ),
        compiler_params=pltpu.CompilerParams(
            dimension_semantics=("parallel", "arbitrary"),
            vmem_limit_bytes=vmem_limit,
        ),
    )(logits, target2d)

    # Combine per-slot partial sums and apply the (scalar) focal transform in plain JAX.
    partials = out.reshape(num_slots, 8, 128)[:, 0, 0]
    logp = jnp.sum(partials) / jnp.float32(n)       # mean CE over the batch
    p = jnp.exp(-logp)
    return (1.0 - p) ** jnp.float32(gamma) * logp


def _reference(logits, target, gamma):
    # Pure-JAX reference matching torch.nn.CrossEntropyLoss (mean reduction) + focal term.
    x = logits.astype(jnp.float32)
    logp_rows = jax.nn.logsumexp(x, axis=-1) - jnp.take_along_axis(
        x, target[:, None].astype(jnp.int32), axis=-1)[:, 0]
    logp = jnp.mean(logp_rows)
    p = jnp.exp(-logp)
    return (1.0 - p) ** gamma * logp


if __name__ == "__main__":
    key = jax.random.PRNGKey(0)
    k1, k2 = jax.random.split(key)

    N, C = 19, 32          # N not a multiple of 8/tile to exercise edge blocks + masking
    GAMMA = 2.0            # module default is 0; use 2.0 for a non-trivial focal term

    logits = jax.random.normal(k1, (N, C), dtype=jnp.float32)
    target = jax.random.randint(k2, (N,), 0, C, dtype=jnp.int32)

    ref = _reference(logits, target, GAMMA)

    # Small explicit tile -> multiple batch tiles, exercises the clamped index_map on
    # two-core chips and the accumulate/finalize path everywhere.
    out = jax.block_until_ready(focal_loss(logits, target, gamma=GAMMA, tile_n=8))
    assert jnp.allclose(out, ref, rtol=1e-5, atol=1e-5), (out, ref)

    # Auto tile-selection path (single large tile).
    out2 = jax.block_until_ready(focal_loss(logits, target, gamma=GAMMA))
    assert jnp.allclose(out2, ref, rtol=1e-5, atol=1e-5), (out2, ref)

    # bf16 pass-through (halves HBM traffic; upcast happens inside the kernel).
    logits_bf16 = logits.astype(jnp.bfloat16)
    out3 = jax.block_until_ready(focal_loss(logits_bf16, target, gamma=GAMMA))
    ref3 = _reference(logits_bf16, target, GAMMA)
    assert jnp.allclose(out3, ref3, rtol=1e-4, atol=1e-5), (out3, ref3)

    print("KERNEL_OK")
</pallas_src>

<mosaic_0001>
module attributes {stable_mosaic.version = 11 : i64} {
  func.func @_focal_nll_kernel(%arg0: i32, %arg1: i32, %arg2: memref<8x32xf32, #tpu.memory_space<vmem>>, %arg3: memref<8x1xi32, #tpu.memory_space<vmem>>, %arg4: memref<8x128xf32, #tpu.memory_space<vmem>>, %arg5: memref<8x1xf32, #tpu.memory_space<vmem>>) attributes {dimension_semantics = [#tpu.dimension_semantics<parallel>, #tpu.dimension_semantics<arbitrary>], iteration_bounds = array<i64: 1, 3>, scalar_prefetch = 0 : i64, scratch_operands = 1 : i64, tpu.core_type = #tpu.core_type<tc>, window_params = [{transform_indices = @transform_0, window_bounds = array<i64: 8, 32>}, {transform_indices = @transform_1, window_bounds = array<i64: 8, 1>}, {transform_indices = @transform_2, window_bounds = array<i64: 8, 128>}]} {
    %c0_i32 = arith.constant 0 : i32
    %0 = arith.cmpi eq, %arg1, %c0_i32 : i32
    %1 = arith.extui %0 : i1 to i32
    %c0_i32_0 = arith.constant 0 : i32
    %2 = arith.cmpi ne, %1, %c0_i32_0 : i32
    scf.if %2 {
      %cst_13 = arith.constant 0.000000e+00 : f32
      %38 = vector.broadcast %cst_13 : f32 to vector<8x1xf32>
      %c0_14 = arith.constant 0 : index
      %c0_15 = arith.constant 0 : index
      %39 = vector.load %arg5[%c0_14, %c0_15] : memref<8x1xf32, #tpu.memory_space<vmem>>, vector<8x1xf32>
      tpu.vector_store %arg5[%c0_14, %c0_15], %38 {strides = array<i32>} : memref<8x1xf32, #tpu.memory_space<vmem>>, vector<8x1xf32>,
    } else {
    }
    %c0 = arith.constant 0 : index
    %c0_1 = arith.constant 0 : index
    %3 = vector.load %arg2[%c0, %c0_1] : memref<8x32xf32, #tpu.memory_space<vmem>>, vector<8x32xf32>
    %c0_2 = arith.constant 0 : index
    %c0_3 = arith.constant 0 : index
    %4 = vector.load %arg3[%c0_2, %c0_3] : memref<8x1xi32, #tpu.memory_space<vmem>>, vector<8x1xi32>
    %cst = arith.constant dense<0xFF800000> : vector<8xf32>
    %5 = vector.multi_reduction <maximumf>, %3, %cst [1] : vector<8x32xf32> to vector<8xf32>
    %6 = vector.shape_cast %5 : vector<8xf32> to vector<8x1xf32>
    %7 = vector.broadcast %6 : vector<8x1xf32> to vector<8x32xf32>
    %8 = arith.subf %3, %7 : vector<8x32xf32>
    %9 = math.exp %8 : vector<8x32xf32>
    %cst_4 = arith.constant dense<0.000000e+00> : vector<8xf32>
    %10 = vector.multi_reduction <add>, %9, %cst_4 [1] : vector<8x32xf32> to vector<8xf32>
    %11 = vector.shape_cast %10 : vector<8xf32> to vector<8x1xf32>
    %12 = math.log %11 : vector<8x1xf32>
    %13 = arith.addf %6, %12 : vector<8x1xf32>
    %14 = tpu.iota {dimensions = array<i32: 1>} : vector<8x32xi32>
    %15 = vector.broadcast %4 : vector<8x1xi32> to vector<8x32xi32>
    %16 = arith.cmpi eq, %14, %15 : vector<8x32xi32>
    %cst_5 = arith.constant 0.000000e+00 : f32
    %17 = vector.broadcast %cst_5 : f32 to vector<8x32xf32>
    %18 = arith.select %16, %3, %17 : vector<8x32xi1>, vector<8x32xf32>
    %cst_6 = arith.constant dense<0.000000e+00> : vector<8xf32>
    %19 = vector.multi_reduction <add>, %18, %cst_6 [1] : vector<8x32xf32> to vector<8xf32>
    %20 = vector.shape_cast %19 : vector<8xf32> to vector<8x1xf32>
    %21 = arith.subf %13, %20 : vector<8x1xf32>
    %c3_i32 = arith.constant 3 : i32
    %22 = arith.muli %arg0, %c3_i32 : i32
    %23 = arith.addi %22, %arg1 : i32
    %c8_i32 = arith.constant 8 : i32
    %24 = arith.muli %23, %c8_i32 : i32
    %25 = tpu.iota {dimensions = array<i32: 0>} : vector<8x1xi32>
    %26 = vector.broadcast %24 : i32 to vector<8x1xi32>
    %27 = arith.addi %26, %25 : vector<8x1xi32>
    %c19_i32 = arith.constant 19 : i32
    %28 = vector.broadcast %c19_i32 : i32 to vector<8x1xi32>
    %29 = arith.cmpi slt, %27, %28 : vector<8x1xi32>
    %cst_7 = arith.constant 0.000000e+00 : f32
    %30 = vector.broadcast %cst_7 : f32 to vector<8x1xf32>
    %31 = arith.select %29, %21, %30 : vector<8x1xi1>, vector<8x1xf32>
    %c0_8 = arith.constant 0 : index
    %c0_9 = arith.constant 0 : index
    %32 = vector.load %arg5[%c0_8, %c0_9] : memref<8x1xf32, #tpu.memory_space<vmem>>, vector<8x1xf32>
    %33 = arith.addf %32, %31 : vector<8x1xf32>
    %c0_10 = arith.constant 0 : index
    %c0_11 = arith.constant 0 : index
    %34 = vector.load %arg5[%c0_10, %c0_11] : memref<8x1xf32, #tpu.memory_space<vmem>>, vector<8x1xf32>
    tpu.vector_store %arg5[%c0_10, %c0_11], %33 {strides = array<i32>} : memref<8x1xf32, #tpu.memory_space<vmem>>, vector<8x1xf32>,
    %c2_i32 = arith.constant 2 : i32
    %35 = arith.cmpi eq, %arg1, %c2_i32 : i32
    %36 = arith.extui %35 : i1 to i32
    %c0_i32_12 = arith.constant 0 : i32
    %37 = arith.cmpi ne, %36, %c0_i32_12 : i32
    scf.if %37 {
      %c0_13 = arith.constant 0 : index
      %c0_14 = arith.constant 0 : index
      %38 = vector.load %arg5[%c0_13, %c0_14] : memref<8x1xf32, #tpu.memory_space<vmem>>, vector<8x1xf32>
      %39 = vector.shape_cast %38 : vector<8x1xf32> to vector<1x8x1xf32>
      %cst_15 = arith.constant dense<0.000000e+00> : vector<1xf32>
      %40 = vector.multi_reduction <add>, %39, %cst_15 [1, 2] : vector<1x8x1xf32> to vector<1xf32>
      %41 = vector.shape_cast %40 : vector<1xf32> to vector<1x1x1xf32>
      %42 = vector.extract %41[0, 0, 0] : f32 from vector<1x1x1xf32>
      %43 = vector.broadcast %42 : f32 to vector<8x128xf32>
      %c0_16 = arith.constant 0 : index
      %c0_17 = arith.constant 0 : index
      %44 = vector.load %arg4[%c0_16, %c0_17] : memref<8x128xf32, #tpu.memory_space<vmem>>, vector<8x128xf32>
      tpu.vector_store %arg4[%c0_16, %c0_17], %43 {strides = array<i32>} : memref<8x128xf32, #tpu.memory_space<vmem>>, vector<8x128xf32>,
    } else {
    }
    return
  }
  func.func @transform_0(%arg0: i32, %arg1: i32) -> (i32, i32) {
    %c3_i32 = arith.constant 3 : i32
    %0 = arith.muli %arg0, %c3_i32 : i32
    %1 = arith.addi %0, %arg1 : i32
    %c2_i32 = arith.constant 2 : i32
    %2 = arith.minsi %1, %c2_i32 : i32
    %c0_i32 = arith.constant 0 : i32
    %c0_i32_0 = arith.constant 0 : i32
    return %2, %c0_i32 : i32, i32
  }
  func.func @transform_1(%arg0: i32, %arg1: i32) -> (i32, i32) {
    %c3_i32 = arith.constant 3 : i32
    %0 = arith.muli %arg0, %c3_i32 : i32
    %1 = arith.addi %0, %arg1 : i32
    %c2_i32 = arith.constant 2 : i32
    %2 = arith.minsi %1, %c2_i32 : i32
    %c0_i32 = arith.constant 0 : i32
    %c0_i32_0 = arith.constant 0 : i32
    return %2, %c0_i32 : i32, i32
  }
  func.func @transform_2(%arg0: i32, %arg1: i32) -> (i32, i32) {
    %c0_i32 = arith.constant 0 : i32
    %c0_i32_0 = arith.constant 0 : i32
    return %arg0, %c0_i32 : i32, i32
  }
}

</mosaic_0001>

<llo_original>
// kernel: tpu_custom_call.1
$region0: #{tpu_custom_call.1}
  #allocation0 [shape = 'u32[]', space=smem, size = 0x4, offset = 0x4, fixed_abs, tag = 'smem constant byte address 0x4 - core index']
  #allocation1 [shape = 'u32[72,128]{1,0:T(1,128)}', space=vmem, size = 0x9000, scoped, tag = 'internal scratch']
  #allocation2 [shape = 'f32[8,1]{1,0:T(8,128)}', space=vmem, size = 0x1000, scoped, tag = 'scratch operand']
  %s0 = inlined_call_operand.vmem [shape: f32[19,32], index: 0, kind: input, shape index: {}]
  %s1 = inlined_call_operand.vmem [shape: s32[19,1], index: 1, kind: input, shape index: {}]
  %s2 = inlined_call_operand.hbm [shape: f32[8,128], index: 2, kind: output, shape index: {}]
  %s3 = sld [smem:[#allocation0]]
  $region49: #{tpu_custom_call.1} parent=0
    _
  %s5 = ssub.s32 1, %s3
  %s6 = scalar_select 0, %s5, %s3
  $region1: #{tpu_custom_call.1} parent=0
    #allocation3 [shape = 'u8[4096]{0}', space=vmem, size = 0x1000, scoped, tag = 'output window, operand 0, single buffered']
    #allocation4 [shape = 's32[2]{0}', space=sflag, size = 0x8, scoped, tag = 'scoped memory for tpu_custom_call.1']
    %7 = vsyncpa [#allocation4], 0
    loop: start=0, step=1, limit=5
    $region2: #{tpu_custom_call.1} parent=1 // loop_pre_header
      _
    $region3: #{tpu_custom_call.1} parent=1 // loop_header
      %s9 = sphi 0, %s13
      %p10 = scmp.ge.s32.totalorder %s9, 5
      %s16 = sphi 0, %s28
      %s17 = sphi 0, %s24
      %s18 = sphi 0, %s16
      %s19 = sphi 0, %s17
      %s20 = sphi 0, %s18
      %s21 = sphi 0, %s19
      %s39 = sphi 0, %s41
      %s42 = sphi 0, %s39
      %s43 = sphi 0, %s42
      %s59 = sphi 0, %s43
      %s73 = sphi 0, %s75
      %s76 = sphi 0, %s73
      %s77 = sphi 0, %s76
      %s93 = sphi 0, %s77
      %s99 = sphi 0, %s101
      %s102 = sphi 0, %s99
      %s103 = sphi 0, %s102
      %s119 = sphi 0, %s103
    $region4: #{tpu_custom_call.1} parent=1 // loop_header_branch
      %12 = sbr.rel (%p10) target = $region8
    $region5: #{tpu_custom_call.1} parent=1 // loop_body
      %s14 = ssub.s32 %s9, 1
      %s15 = ssub.s32 %s9, 2
      %s22 = sadd.s32 1, %s17
      %p23 = scmp.ge.s32.totalorder %s22, 3
      %s24 = scalar_select %p23, 0, %s22
      %s25 = sadd.s32 1, %s16
      %s26 = scalar_select %p23, %s25, %s16
      %p27 = scmp.ge.s32.totalorder %s26, 1
      %s28 = scalar_select %p27, 0, %s26
      %s29 = smul.u32 %s16, 3
      %s30 = sadd.s32 %s29, %s17
      %p31 = scmp.lt.s32.totalorder %s30, 2
      %s32 = scalar_select %p31, %s30, 2
      %s33 = smul.u32 %s28, 3
      %s34 = sadd.s32 %s33, %s24
      %p35 = scmp.lt.s32.totalorder %s34, 2
      %s36 = scalar_select %p35, %s34, 2
      %s37 = ssub.s32 %s32, %s36
      %p38 = scmp.eq.s32.totalorder %s37, 0
      %s40 = sadd.s32 %s39, 1
      %s41 = scalar_select %p38, %s39, %s40
      %p44 = pneg %p38
      %p45 = scmp.eq.s32.totalorder %s9, 2
      %p46 = por %p44, %p45
      %p47 = scmp.ne.s32.totalorder %s39, %s42
      %p48 = scmp.eq.s32.totalorder %s9, 0
      %p49 = por %p47, %p48
      %p50 = scmp.ne.s32.totalorder %s39, %s42
      %p51 = scmp.eq.s32.totalorder %s14, 2
      %p52 = por %p50, %p51
      %p53 = scmp.ne.s32.totalorder %s42, %s43
      %p54 = scmp.eq.s32.totalorder %s14, 0
      %p55 = por %p53, %p54
      %p56 = scmp.ne.s32.totalorder %s42, %s43
      %p57 = scmp.eq.s32.totalorder %s15, 2
      %p58 = por %p56, %p57
      %p60 = scmp.ne.s32.totalorder %s43, %s59
      %p61 = scmp.eq.s32.totalorder %s15, 0
      %p62 = por %p60, %p61
      %s63 = smul.u32 %s16, 3
      %s64 = sadd.s32 %s63, %s17
      %p65 = scmp.lt.s32.totalorder %s64, 2
      %s66 = scalar_select %p65, %s64, 2
      %s67 = smul.u32 %s28, 3
      %s68 = sadd.s32 %s67, %s24
      %p69 = scmp.lt.s32.totalorder %s68, 2
      %s70 = scalar_select %p69, %s68, 2
      %s71 = ssub.s32 %s66, %s70
      %p72 = scmp.eq.s32.totalorder %s71, 0
      %s74 = sadd.s32 %s73, 1
      %s75 = scalar_select %p72, %s73, %s74
      %p78 = pneg %p72
      %p79 = scmp.eq.s32.totalorder %s9, 2
      %p80 = por %p78, %p79
      %p81 = scmp.ne.s32.totalorder %s73, %s76
      %p82 = scmp.eq.s32.totalorder %s9, 0
      %p83 = por %p81, %p82
      %p84 = scmp.ne.s32.totalorder %s73, %s76
      %p85 = scmp.eq.s32.totalorder %s14, 2
      %p86 = por %p84, %p85
      %p87 = scmp.ne.s32.totalorder %s76, %s77
      %p88 = scmp.eq.s32.totalorder %s14, 0
      %p89 = por %p87, %p88
      %p90 = scmp.ne.s32.totalorder %s76, %s77
      %p91 = scmp.eq.s32.totalorder %s15, 2
      %p92 = por %p90, %p91
      %p94 = scmp.ne.s32.totalorder %s77, %s93
      %p95 = scmp.eq.s32.totalorder %s15, 0
      %p96 = por %p94, %p95
      %s97 = ssub.s32 %s16, %s28
      %p98 = scmp.eq.s32.totalorder %s97, 0
      %s100 = sadd.s32 %s99, 1
      %s101 = scalar_select %p98, %s99, %s100
      %p104 = pneg %p98
      %p105 = scmp.eq.s32.totalorder %s9, 2
      %p106 = por %p104, %p105
      %p107 = scmp.ne.s32.totalorder %s99, %s102
      %p108 = scmp.eq.s32.totalorder %s9, 0
      %p109 = por %p107, %p108
      %p110 = scmp.ne.s32.totalorder %s99, %s102
      %p111 = scmp.eq.s32.totalorder %s14, 2
      %p112 = por %p110, %p111
      %p113 = scmp.ne.s32.totalorder %s102, %s103
      %p114 = scmp.eq.s32.totalorder %s14, 0
      %p115 = por %p113, %p114
      %p116 = scmp.ne.s32.totalorder %s102, %s103
      %p117 = scmp.eq.s32.totalorder %s15, 2
      %p118 = por %p116, %p117
      %p120 = scmp.ne.s32.totalorder %s103, %s119
      %p121 = scmp.eq.s32.totalorder %s15, 0
      %p122 = por %p120, %p121
      %p123 = scmp.le.s32.totalorder 1, %s9
      %p124 = scmp.lt.s32.totalorder %s9, 4
      %p125 = pnand %p123, %p124
      %p126 = pneg %p125
      // Predicated region
      $region9: #{tpu_custom_call.1} parent=5 // pred_check
        _
      $region10: #{tpu_custom_call.1} parent=5 // pred_check_branch
        %128 = sbr.rel (%p125) target = $region12
      $region11: #{tpu_custom_call.1} parent=5 // pred_region
        %s129 = ssub.s32 %s9, 1
      $region12: #{tpu_custom_call.1} parent=5 // pred_fallthru
        _
      %p130 = scmp.lt.s32.totalorder %s9, 3
      // Predicated region
      $region13: #{tpu_custom_call.1} parent=5 // pred_check
        %p131 = pneg %p130
      $region14: #{tpu_custom_call.1} parent=5 // pred_check_branch
        %133 = sbr.rel (%p131) target = $region16
      $region15: #{tpu_custom_call.1} parent=5 // pred_region
        // Predicated region
        $region17: #{tpu_custom_call.1} parent=15 // pred_check
          %p134 = pneg %p49
        $region18: #{tpu_custom_call.1} parent=15 // pred_check_branch
          %136 = sbr.rel (%p134) target = $region20
        $region19: #{tpu_custom_call.1} parent=15 // pred_region
          %s137 = smul.u32 %s16, 3
          %s138 = sadd.s32 %s137, %s17
          %p139 = scmp.lt.s32.totalorder %s138, 2
          %s140 = scalar_select %p139, %s138, 2
          %p141 = scmp.lt.s32.totalorder %s140, 2
          %s142 = scalar_select %p141, %s140, 2
          %s143 = smul.addr %s142, 8
          %s144 = scalar_lea.vmem %s0, %s143
          %s145 = smul.u32 %s16, 3
          %s146 = sadd.s32 %s145, %s17
          %p147 = scmp.lt.s32.totalorder %s146, 2
          %s148 = scalar_select %p147, %s146, 2
        $region20: #{tpu_custom_call.1} parent=15 // pred_fallthru
          _
        // Predicated region
        $region21: #{tpu_custom_call.1} parent=15 // pred_check
          %p149 = pneg %p83
        $region22: #{tpu_custom_call.1} parent=15 // pred_check_branch
          %151 = sbr.rel (%p149) target = $region24
        $region23: #{tpu_custom_call.1} parent=15 // pred_region
          %s152 = smul.u32 %s16, 3
          %s153 = sadd.s32 %s152, %s17
          %p154 = scmp.lt.s32.totalorder %s153, 2
          %s155 = scalar_select %p154, %s153, 2
          %p156 = scmp.lt.s32.totalorder %s155, 2
          %s157 = scalar_select %p156, %s155, 2
          %s158 = smul.addr %s157, 8
          %s159 = scalar_lea.vmem %s1, %s158
          %s160 = smul.u32 %s16, 3
          %s161 = sadd.s32 %s160, %s17
          %p162 = scmp.lt.s32.totalorder %s161, 2
          %s163 = scalar_select %p162, %s161, 2
        $region24: #{tpu_custom_call.1} parent=15 // pred_fallthru
          _
      $region16: #{tpu_custom_call.1} parent=5 // pred_fallthru
        _
      %p164 = scmp.le.s32.totalorder 1, %s9
      %p165 = scmp.lt.s32.totalorder %s9, 4
      %p166 = pnand %p164, %p165
      %p167 = pneg %p166
      // Predicated region
      $region25: #{tpu_custom_call.1} parent=5 // pred_check
        _
      $region26: #{tpu_custom_call.1} parent=5 // pred_check_branch
        %169 = sbr.rel (%p166) target = $region28
      $region27: #{tpu_custom_call.1} parent=5 // pred_region
        %s170 = ssub.s32 %s9, 1
        %s171 = smul.u32 %s18, 3
        %s172 = sadd.s32 %s171, %s19
        %p173 = scmp.lt.s32.totalorder %s172, 2
        %s174 = scalar_select %p173, %s172, 2
        %p175 = scmp.lt.s32.totalorder %s174, 2
        %s176 = scalar_select %p175, %s174, 2
        %s177 = smul.addr %s176, 8
        %s178 = scalar_lea.vmem %s0, %s177
        %p179 = pneg %p55
        %p180 = pneg %p52
        %s181 = smul.u32 %s18, 3
        %s182 = sadd.s32 %s181, %s19
        %p183 = scmp.lt.s32.totalorder %s182, 2
        %s184 = scalar_select %p183, %s182, 2
        %p185 = scmp.lt.s32.totalorder %s184, 2
        %s186 = scalar_select %p185, %s184, 2
        %s187 = smul.addr %s186, 8
        %s188 = scalar_lea.vmem %s1, %s187
        %p189 = pneg %p89
        %p190 = pneg %p86
        %p191 = pneg %p115
        %p192 = pneg %p112
        %s193 = smul.u32 %s18, 3
        %s194 = sadd.s32 %s193, %s19
        %p195 = scmp.lt.s32.totalorder %s194, 2
        %s196 = scalar_select %p195, %s194, 2
        %p197 = scmp.lt.s32.totalorder %s196, 2
        %s198 = scalar_select %p197, %s196, 2
        %s199 = smul.addr %s198, 8
        %s200 = scalar_lea.vmem %s0, %s199
        %s201 = smul.u32 %s18, 3
        %s202 = sadd.s32 %s201, %s19
        %p203 = scmp.lt.s32.totalorder %s202, 2
        %s204 = scalar_select %p203, %s202, 2
        %s205 = smul.u32 %s18, 3
        %s206 = sadd.s32 %s205, %s19
        %p207 = scmp.lt.s32.totalorder %s206, 2
        %s208 = scalar_select %p207, %s206, 2
        %p209 = scmp.lt.s32.totalorder %s208, 2
        %s210 = scalar_select %p209, %s208, 2
        %s211 = smul.addr %s210, 8
        %s212 = scalar_lea.vmem %s1, %s211
        %s213 = smul.u32 %s18, 3
        %s214 = sadd.s32 %s213, %s19
        %p215 = scmp.lt.s32.totalorder %s214, 2
        %s216 = scalar_select %p215, %s214, 2
        %p217 = scmp.eq.s32.totalorder %s19, 0
        // Predicated region
        $region29: #{tpu_custom_call.1} parent=27 // pred_check
          %p218 = pneg %p217
        $region30: #{tpu_custom_call.1} parent=27 // pred_check_branch
          %220 = sbr.rel (%p218) target = $region32
        $region31: #{tpu_custom_call.1} parent=27 // pred_region
          %vm221 = vcmask 7168
          %222 = vst.msk [vmem:[#allocation2] sm:$0xff] %vm221, 0.0
        $region32: #{tpu_custom_call.1} parent=27 // pred_fallthru
          _
        %v223 = vld [vmem:[%s200] sm:$0xff]
        %v224 = vld [vmem:[%s212] sm:$0xff]
        %vm225 = vcmask 261120
        %v226 = vsel %vm225, %v223, -inf
        %227 = vmax.xlane.f32.xlu0 %v226
        %v228 = vpop.xlane.xlu0 %227
        %v229 = vsub.f32 %v223, %v228
        %v230 = vmul.f32 %v229, 1.442695
        %v231 = vpow.pop %v230
        %v232 = vsel %vm225, %v231, 0.0
        %233 = vadd.xlane.f32.xlu0 %v232
        %v234 = vpop.xlane.xlu0 %233
        %v235 = vlog2.pop %v234
        %v236 = vmul.f32 %v235, 0.6931472
        %v237 = vadd.f32 %v228, %v236
        %v238 = vlaneseq
        %v239 = vand.u32 %v238, 127
        %240 = vset.pattern.permute.xlu0 0
        %241 = vperm.xlu0 %240, %v224
        %v242 = vpop.permute.xlu0 %241
        %vm243 = vcmp.eq.s32.totalorder %v239, %v242
        %v244 = vsel %vm243, %v223, 0.0
        %v245 = vsel %vm225, %v244, 0.0
        %246 = vadd.xlane.f32.xlu0 %v245
        %v247 = vpop.xlane.xlu0 %246
        %v248 = vsub.f32 %v237, %v247
        %s249 = smul.u32 %s18, 3
        %s250 = sadd.s32 %s249, %s19
        %s251 = smul.u32 %s250, 8
        %v252 = vlaneseq
        %v253 = vshrl.u32 %v252, 7
        %v254 = vstv %s251
        %v255 = vadd.s32 %v254, %v253
        %vm256 = vcmp.lt.s32.totalorder %v255, 19
        %v257 = vsel %vm256, %v248, 0.0
        %v258 = vld [vmem:[#allocation2] sm:$0xff]
        %v259 = vadd.f32 %v258, %v257
        %vm260 = vcmask 7168
        %261 = vst.msk [vmem:[#allocation2] sm:$0xff] %vm260, %v259
        %p262 = scmp.eq.s32.totalorder %s19, 2
        // Predicated region
        $region33: #{tpu_custom_call.1} parent=27 // pred_check
          %p263 = pneg %p262
        $region34: #{tpu_custom_call.1} parent=27 // pred_check_branch
          %265 = sbr.rel (%p263) target = $region36
        $region35: #{tpu_custom_call.1} parent=27 // pred_region
          %v266 = vld [vmem:[#allocation2] sm:$0xff]
          %v267 = vsel %vm260, %v266, 0.0
          %268 = vadd.xlane.f32.xlu0 %v267
          %v269 = vpop.xlane.xlu0 %268
          %v270 = vrot.slane %v269, 4
          %v271 = vadd.f32 %v269, %v270
          %v272 = vrot.slane %v271, 2
          %v273 = vadd.f32 %v271, %v272
          %v274 = vrot.slane %v273, 1
          %v275 = vadd.f32 %v273, %v274
          %s276 = vtos %v275
          %v277 = vstv %s276
          %278 = vst [vmem:[#allocation3] sm:$0xff] %v277
        $region36: #{tpu_custom_call.1} parent=27 // pred_fallthru
          _
        // Predicated region
        $region37: #{tpu_custom_call.1} parent=27 // pred_check
          %p279 = pneg %p112
        $region38: #{tpu_custom_call.1} parent=27 // pred_check_branch
          %281 = sbr.rel (%p279) target = $region40
        $region39: #{tpu_custom_call.1} parent=27 // pred_region
          %283 = vsyncadd [#allocation4], 0
          %s284 = smul.addr %s18, 8
          %s285 = scalar_lea.hbm %s2, %s284
          %s287 = sshll.u32 [#allocation3], 4
          %s288 = int_to_ptr.vmem [resolvable:$true] %s287
          %s289 = sshll.u32 %s285, 4
          %s290 = int_to_ptr.hbm [resolvable:$true] %s289
          %292 = dma.vmem_to_hbm [thread:$0]  %s288, 128, %s290, [#allocation4]
        $region40: #{tpu_custom_call.1} parent=27 // pred_fallthru
          _
        // Predicated region
        $region41: #{tpu_custom_call.1} parent=27 // pred_check
          %p293 = pneg %p112
        $region42: #{tpu_custom_call.1} parent=27 // pred_check_branch
          %295 = sbr.rel (%p293) target = $region44
        $region43: #{tpu_custom_call.1} parent=27 // pred_region
          %297 = dma.done [#allocation4], 128
        $region44: #{tpu_custom_call.1} parent=27 // pred_fallthru
          _
      $region28: #{tpu_custom_call.1} parent=5 // pred_fallthru
        _
      %p298 = scmp.le.s32.totalorder 2, %s9
      // Predicated region
      $region45: #{tpu_custom_call.1} parent=5 // pred_check
        %p299 = pneg %p298
      $region46: #{tpu_custom_call.1} parent=5 // pred_check_branch
        %301 = sbr.rel (%p299) target = $region48
      $region47: #{tpu_custom_call.1} parent=5 // pred_region
        %s302 = ssub.s32 %s9, 2
      $region48: #{tpu_custom_call.1} parent=5 // pred_fallthru
        _
    $region6: #{tpu_custom_call.1} parent=1 // loop_footer
      %s13 = sadd.s32 1, %s9
    $region7: #{tpu_custom_call.1} parent=1 // loop_footer_branch
      %8 = sbr.rel target = $region3
    $region8: #{tpu_custom_call.1} parent=1 // loop_exit
      _
    %303 = vsyncpa [#allocation4], 1
    %s304 = scalar_lea.sflag [#allocation4], 1
    %305 = vsyncpa %s304, 1

</llo_original>
